<compile_context>
chip_gen: v7x
topology: tpu7x:2x2x1
jax: 0.10.0
libtpu: 0.0.40
codegen_flags: <defaults>
</compile_context>

<pallas_src>
import jax
import jax.numpy as jnp
from jax.experimental import pallas as pl
from jax.experimental.pallas import tpu as pltpu


def mlp_kernel(x_ref, w1_ref, b1_ref, w2_ref, b2_ref, w3_ref, b3_ref, o_ref):
    """One batch tile: x_ref (4, TB) -> o_ref (1, TB), batch on the lane axis."""
    x = x_ref[...]                                                      # (4, TB)

    h1 = jnp.dot(w1_ref[...], x, preferred_element_type=jnp.float32)   # (8, TB)
    h1 = jnp.maximum(h1 + b1_ref[...], 0.0)                            # ReLU

    h2 = jnp.dot(w2_ref[...], h1, preferred_element_type=jnp.float32)  # (8, TB)
    h2 = jnp.maximum(h2 + b2_ref[...], 0.0)                            # ReLU

    z = jnp.dot(w3_ref[...], h2, preferred_element_type=jnp.float32)   # (1, TB)
    z = z + b3_ref[...]

    # sigmoid = 1 / (1 + exp(-z)); exp and the approximate reciprocal both run
    # on the EUP slot, keeping the VALU slots free.
    o_ref[...] = pl.reciprocal(1.0 + jnp.exp(-z), approx=True)         # (1, TB)


def nn_model_forward(x, params, *, tile_b=2048):
    """x: (B, 4) float32 -> (B,) float32 (matches the PyTorch module forward)."""
    w1, b1, w2, b2, w3, b3 = params
    B, F = x.shape

    # Pad batch up to a lane-aligned multiple of the tile size, then flip the
    # layout so batch sits on the dense 128-wide lane axis.
    bp = ((B + 127) // 128) * 128
    tb = min(tile_b, bp)
    bp = ((bp + tb - 1) // tb) * tb
    xt = jnp.zeros((F, bp), x.dtype).at[:, :B].set(x.T)                 # (4, Bp)

    resident = lambda shape: pl.BlockSpec(shape, lambda i: (0, 0))      # stays in VMEM

    out = pl.pallas_call(
        mlp_kernel,
        out_shape=jax.ShapeDtypeStruct((1, bp), jnp.float32),
        grid=(bp // tb,),
        in_specs=[
            pl.BlockSpec((F, tb), lambda i: (0, i)),   # x tile: batch on lanes
            resident(w1.shape),                        # (8, 4)
            resident(b1.shape),                        # (8, 1)
            resident(w2.shape),                        # (8, 8)
            resident(b2.shape),                        # (8, 1)
            resident(w3.shape),                        # (1, 8)
            resident(b3.shape),                        # (1, 1)
        ],
        out_specs=pl.BlockSpec((1, tb), lambda i: (0, i)),               # lane-dense
        compiler_params=pltpu.CompilerParams(
            dimension_semantics=("parallel",)),        # megacore-shard batch tiles
    )(xt, w1, b1, w2, b2, w3, b3)

    return out[0, :B]                                  # squeeze(-1) semantics


def init_params(key):
    """Mimics nn.Linear init U(-1/sqrt(fan_in), 1/sqrt(fan_in)).

    Weights are stored as (out_features, in_features) (PyTorch convention) so the
    kernel computes W @ x directly in the flipped layout.  Biases are (out, 1)
    columns so they broadcast across the batch/lane axis.
    """
    k1, k2, k3, k4, k5, k6 = jax.random.split(key, 6)

    def unif(k, shape, fan_in):
        bound = 1.0 / jnp.sqrt(float(fan_in))
        return jax.random.uniform(k, shape, jnp.float32, -bound, bound)

    w1 = unif(k1, (8, 4), 4)
    b1 = unif(k2, (8, 1), 4)
    w2 = unif(k3, (8, 8), 8)
    b2 = unif(k4, (8, 1), 8)
    w3 = unif(k5, (1, 8), 8)
    b3 = unif(k6, (1, 1), 8)
    return (w1, b1, w2, b2, w3, b3)


def reference_forward(x, params):
    """Pure-JAX reference with the same semantics as the PyTorch module."""
    w1, b1, w2, b2, w3, b3 = params
    h = jax.nn.relu(w1 @ x.T + b1)          # (8, B)
    h = jax.nn.relu(w2 @ h + b2)            # (8, B)
    z = jax.nn.sigmoid(w3 @ h + b3)         # (1, B)
    return z[0]


if __name__ == "__main__":
    key = jax.random.PRNGKey(0)
    k_params, k_x1, k_x2 = jax.random.split(key, 3)

    params = init_params(k_params)

    # Small shape consistent with the module: batch=8, in_features=4.
    x_small = jax.random.normal(k_x1, (8, 4), dtype=jnp.float32)
    y_small = jax.block_until_ready(nn_model_forward(x_small, params))
    y_small_ref = reference_forward(x_small, params)
    assert y_small.shape == (8,), y_small.shape
    assert jnp.allclose(y_small, y_small_ref, atol=1e-3, rtol=1e-3), (y_small, y_small_ref)

    # Non-tile-aligned larger batch to exercise the multi-tile grid + padding path.
    x_big = jax.random.normal(k_x2, (3000, 4), dtype=jnp.float32)
    y_big = jax.block_until_ready(nn_model_forward(x_big, params, tile_b=1024))
    y_big_ref = reference_forward(x_big, params)
    assert y_big.shape == (3000,), y_big.shape
    assert jnp.allclose(y_big, y_big_ref, atol=1e-3, rtol=1e-3)

    print("KERNEL_OK")
</pallas_src>

<mosaic_0001>
module attributes {stable_mosaic.version = 11 : i64} {
  func.func @mlp_kernel(%arg0: i32, %arg1: memref<4x128xf32, #tpu.memory_space<vmem>>, %arg2: memref<8x4xf32, #tpu.memory_space<vmem>>, %arg3: memref<8x1xf32, #tpu.memory_space<vmem>>, %arg4: memref<8x8xf32, #tpu.memory_space<vmem>>, %arg5: memref<8x1xf32, #tpu.memory_space<vmem>>, %arg6: memref<1x8xf32, #tpu.memory_space<vmem>>, %arg7: memref<1x1xf32, #tpu.memory_space<vmem>>, %arg8: memref<1x128xf32, #tpu.memory_space<vmem>>) attributes {dimension_semantics = [#tpu.dimension_semantics<parallel>], iteration_bounds = array<i64: 1>, scalar_prefetch = 0 : i64, scratch_operands = 0 : i64, tpu.core_type = #tpu.core_type<tc>, window_params = [{transform_indices = @transform_0, window_bounds = array<i64: 4, 128>}, {pipeline_mode = #tpu.pipeline_mode<synchronous>, transform_indices = @transform_1, window_bounds = array<i64: 8, 4>}, {pipeline_mode = #tpu.pipeline_mode<synchronous>, transform_indices = @transform_2, window_bounds = array<i64: 8, 1>}, {pipeline_mode = #tpu.pipeline_mode<synchronous>, transform_indices = @transform_3, window_bounds = array<i64: 8, 8>}, {pipeline_mode = #tpu.pipeline_mode<synchronous>, transform_indices = @transform_4, window_bounds = array<i64: 8, 1>}, {pipeline_mode = #tpu.pipeline_mode<synchronous>, transform_indices = @transform_5, window_bounds = array<i64: 1, 8>}, {pipeline_mode = #tpu.pipeline_mode<synchronous>, transform_indices = @transform_6, window_bounds = array<i64: 1, 1>}, {transform_indices = @transform_7, window_bounds = array<i64: 1, 128>}]} {
    %c0 = arith.constant 0 : index
    %c0_0 = arith.constant 0 : index
    %0 = vector.load %arg1[%c0, %c0_0] : memref<4x128xf32, #tpu.memory_space<vmem>>, vector<4x128xf32>
    %c0_1 = arith.constant 0 : index
    %c0_2 = arith.constant 0 : index
    %1 = vector.load %arg2[%c0_1, %c0_2] : memref<8x4xf32, #tpu.memory_space<vmem>>, vector<8x4xf32>
    %cst = arith.constant dense<0.000000e+00> : vector<8x128xf32>
    %2 = tpu.matmul %1, %0, %cst {dimension_numbers = #tpu.dot_dimension_numbers<[1], [0], [0], [1], [0, 0, 1, 1], [], []>} : vector<8x4xf32>, vector<4x128xf32>, vector<8x128xf32> -> vector<8x128xf32>
    %c0_3 = arith.constant 0 : index
    %c0_4 = arith.constant 0 : index
    %3 = vector.load %arg3[%c0_3, %c0_4] : memref<8x1xf32, #tpu.memory_space<vmem>>, vector<8x1xf32>
    %4 = vector.broadcast %3 : vector<8x1xf32> to vector<8x128xf32>
    %5 = arith.addf %2, %4 : vector<8x128xf32>
    %cst_5 = arith.constant 0.000000e+00 : f32
    %6 = vector.broadcast %cst_5 : f32 to vector<8x128xf32>
    %7 = arith.maximumf %5, %6 : vector<8x128xf32>
    %c0_6 = arith.constant 0 : index
    %c0_7 = arith.constant 0 : index
    %8 = vector.load %arg4[%c0_6, %c0_7] : memref<8x8xf32, #tpu.memory_space<vmem>>, vector<8x8xf32>
    %cst_8 = arith.constant dense<0.000000e+00> : vector<8x128xf32>
    %9 = tpu.matmul %8, %7, %cst_8 {dimension_numbers = #tpu.dot_dimension_numbers<[1], [0], [0], [1], [0, 0, 1, 1], [], []>} : vector<8x8xf32>, vector<8x128xf32>, vector<8x128xf32> -> vector<8x128xf32>
    %c0_9 = arith.constant 0 : index
    %c0_10 = arith.constant 0 : index
    %10 = vector.load %arg5[%c0_9, %c0_10] : memref<8x1xf32, #tpu.memory_space<vmem>>, vector<8x1xf32>
    %11 = vector.broadcast %10 : vector<8x1xf32> to vector<8x128xf32>
    %12 = arith.addf %9, %11 : vector<8x128xf32>
    %cst_11 = arith.constant 0.000000e+00 : f32
    %13 = vector.broadcast %cst_11 : f32 to vector<8x128xf32>
    %14 = arith.maximumf %12, %13 : vector<8x128xf32>
    %c0_12 = arith.constant 0 : index
    %c0_13 = arith.constant 0 : index
    %15 = vector.load %arg6[%c0_12, %c0_13] : memref<1x8xf32, #tpu.memory_space<vmem>>, vector<1x8xf32>
    %cst_14 = arith.constant dense<0.000000e+00> : vector<1x128xf32>
    %16 = tpu.matmul %15, %14, %cst_14 {dimension_numbers = #tpu.dot_dimension_numbers<[1], [0], [0], [1], [0, 0, 1, 1], [], []>} : vector<1x8xf32>, vector<8x128xf32>, vector<1x128xf32> -> vector<1x128xf32>
    %c0_15 = arith.constant 0 : index
    %c0_16 = arith.constant 0 : index
    %17 = vector.load %arg7[%c0_15, %c0_16] : memref<1x1xf32, #tpu.memory_space<vmem>>, vector<1x1xf32>
    %18 = vector.broadcast %17 : vector<1x1xf32> to vector<1x128xf32>
    %19 = arith.addf %16, %18 : vector<1x128xf32>
    %cst_17 = arith.constant 0.000000e+00 : f32
    %20 = vector.broadcast %cst_17 : f32 to vector<1x128xf32>
    %21 = arith.subf %20, %19 : vector<1x128xf32>
    %22 = math.exp %21 : vector<1x128xf32>
    %cst_18 = arith.constant 1.000000e+00 : f32
    %23 = vector.broadcast %cst_18 : f32 to vector<1x128xf32>
    %24 = arith.addf %23, %22 : vector<1x128xf32>
    %25 = tpu.reciprocal %24 {approx = true} : vector<1x128xf32> -> vector<1x128xf32>
    %c0_19 = arith.constant 0 : index
    %c0_20 = arith.constant 0 : index
    %26 = vector.load %arg8[%c0_19, %c0_20] : memref<1x128xf32, #tpu.memory_space<vmem>>, vector<1x128xf32>
    tpu.vector_store %arg8[%c0_19, %c0_20], %25 {strides = array<i32>} : memref<1x128xf32, #tpu.memory_space<vmem>>, vector<1x128xf32>,
    return
  }
  func.func @transform_0(%arg0: i32) -> (i32, i32) {
    %c0_i32 = arith.constant 0 : i32
    %c0_i32_0 = arith.constant 0 : i32
    return %c0_i32, %arg0 : i32, i32
  }
  func.func @transform_1(%arg0: i32) -> (i32, i32) {
    %c0_i32 = arith.constant 0 : i32
    %c0_i32_0 = arith.constant 0 : i32
    %c0_i32_1 = arith.constant 0 : i32
    return %c0_i32, %c0_i32_0 : i32, i32
  }
  func.func @transform_2(%arg0: i32) -> (i32, i32) {
    %c0_i32 = arith.constant 0 : i32
    %c0_i32_0 = arith.constant 0 : i32
    %c0_i32_1 = arith.constant 0 : i32
    return %c0_i32, %c0_i32_0 : i32, i32
  }
  func.func @transform_3(%arg0: i32) -> (i32, i32) {
    %c0_i32 = arith.constant 0 : i32
    %c0_i32_0 = arith.constant 0 : i32
    %c0_i32_1 = arith.constant 0 : i32
    return %c0_i32, %c0_i32_0 : i32, i32
  }
  func.func @transform_4(%arg0: i32) -> (i32, i32) {
    %c0_i32 = arith.constant 0 : i32
    %c0_i32_0 = arith.constant 0 : i32
    %c0_i32_1 = arith.constant 0 : i32
    return %c0_i32, %c0_i32_0 : i32, i32
  }
  func.func @transform_5(%arg0: i32) -> (i32, i32) {
    %c0_i32 = arith.constant 0 : i32
    %c0_i32_0 = arith.constant 0 : i32
    %c0_i32_1 = arith.constant 0 : i32
    return %c0_i32, %c0_i32_0 : i32, i32
  }
  func.func @transform_6(%arg0: i32) -> (i32, i32) {
    %c0_i32 = arith.constant 0 : i32
    %c0_i32_0 = arith.constant 0 : i32
    %c0_i32_1 = arith.constant 0 : i32
    return %c0_i32, %c0_i32_0 : i32, i32
  }
  func.func @transform_7(%arg0: i32) -> (i32, i32) {
    %c0_i32 = arith.constant 0 : i32
    %c0_i32_0 = arith.constant 0 : i32
    return %c0_i32, %arg0 : i32, i32
  }
}

</mosaic_0001>

<llo_original>
// kernel: tpu_custom_call.1
$region0: #{tpu_custom_call.1}
  #allocation0 [shape = 'u32[]', space=smem, size = 0x4, offset = 0x4, fixed_abs, tag = 'smem constant byte address 0x4 - core index']
  #allocation1 [shape = 'u32[144,128]{1,0:T(1,128)}', space=vmem, size = 0x12000, scoped, tag = 'internal scratch']
  #allocation2 [shape = 'f32[1,1]{1,0:T(1,128)S(1)}', space=vmem, size = 0x200, scoped, tag = 'scoped memory for tpu_custom_call.1']
  %s0 = inlined_call_operand.vmem [shape: f32[4,128], index: 0, kind: input, shape index: {}]
  %s1 = inlined_call_operand.vmem [shape: f32[8,4], index: 1, kind: input, shape index: {}]
  %s2 = inlined_call_operand.vmem [shape: f32[8,1], index: 2, kind: input, shape index: {}]
  %s3 = inlined_call_operand.vmem [shape: f32[8,8], index: 3, kind: input, shape index: {}]
  %s4 = inlined_call_operand.vmem [shape: f32[8,1], index: 4, kind: input, shape index: {}]
  %s5 = inlined_call_operand.vmem [shape: f32[1,8], index: 5, kind: input, shape index: {}]
  %s6 = inlined_call_operand.<no memory space> [shape: f32[1,1], index: 6, kind: input, shape index: {}]
  %s7 = inlined_call_operand.hbm [shape: f32[1,128], index: 7, kind: output, shape index: {}]
  %s8 = sld [smem:[#allocation0]]
  $region38: #{tpu_custom_call.1} parent=0
    _
  %s10 = ssub.s32 1, %s8
  %s11 = scalar_select 0, %s10, %s8
  %v12 = vstv %s6
  %13 = vst [vmem:[#allocation2] sm:$0x1] %v12
  $region1: #{tpu_custom_call.1} parent=0
    #allocation3 [shape = 'u8[512]{0}', space=vmem, size = 0x400, scoped, tag = 'output window, operand 0, single buffered']
    #allocation4 [shape = 's32[1]{0}', space=sflag, size = 0x4, scoped, tag = 'scoped memory for tpu_custom_call.1']
    %14 = vsyncpa [#allocation4], 0
    // Predicated region
    $region2: #{tpu_custom_call.1} parent=1 // pred_check
      _
    $region3: #{tpu_custom_call.1} parent=1 // pred_check_branch
      %16 = sbr.rel (0) target = $region5
    $region4: #{tpu_custom_call.1} parent=1 // pred_region
      _
    $region5: #{tpu_custom_call.1} parent=1 // pred_fallthru
      _
    // Predicated region
    $region6: #{tpu_custom_call.1} parent=1 // pred_check
      _
    $region7: #{tpu_custom_call.1} parent=1 // pred_check_branch
      %18 = sbr.rel (0) target = $region9
    $region8: #{tpu_custom_call.1} parent=1 // pred_region
      _
    $region9: #{tpu_custom_call.1} parent=1 // pred_fallthru
      _
    // Predicated region
    $region10: #{tpu_custom_call.1} parent=1 // pred_check
      _
    $region11: #{tpu_custom_call.1} parent=1 // pred_check_branch
      %20 = sbr.rel (0) target = $region13
    $region12: #{tpu_custom_call.1} parent=1 // pred_region
      _
    $region13: #{tpu_custom_call.1} parent=1 // pred_fallthru
      _
    // Predicated region
    $region14: #{tpu_custom_call.1} parent=1 // pred_check
      _
    $region15: #{tpu_custom_call.1} parent=1 // pred_check_branch
      %22 = sbr.rel (0) target = $region17
    $region16: #{tpu_custom_call.1} parent=1 // pred_region
      _
    $region17: #{tpu_custom_call.1} parent=1 // pred_fallthru
      _
    // Predicated region
    $region18: #{tpu_custom_call.1} parent=1 // pred_check
      _
    $region19: #{tpu_custom_call.1} parent=1 // pred_check_branch
      %24 = sbr.rel (0) target = $region21
    $region20: #{tpu_custom_call.1} parent=1 // pred_region
      _
    $region21: #{tpu_custom_call.1} parent=1 // pred_fallthru
      _
    // Predicated region
    $region22: #{tpu_custom_call.1} parent=1 // pred_check
      _
    $region23: #{tpu_custom_call.1} parent=1 // pred_check_branch
      %26 = sbr.rel (0) target = $region25
    $region24: #{tpu_custom_call.1} parent=1 // pred_region
      _
    $region25: #{tpu_custom_call.1} parent=1 // pred_fallthru
      _
    // Predicated region
    $region26: #{tpu_custom_call.1} parent=1 // pred_check
      _
    $region27: #{tpu_custom_call.1} parent=1 // pred_check_branch
      %28 = sbr.rel (0) target = $region29
    $region28: #{tpu_custom_call.1} parent=1 // pred_region
      _
    $region29: #{tpu_custom_call.1} parent=1 // pred_fallthru
      _
    %v29 = vld [vmem:[%s0] sm:$0xf]
    %v30 = vld [vmem:[%s1] sm:$0xff]
    %v31 = vld [vmem:[%s2] sm:$0xff]
    %33 = vset.pattern.permute.xlu0 0
    %34 = vperm.xlu0 %33, %v31
    %v35 = vpop.permute.xlu0 %34
    %vm37 = vcmask 31744
    %v39 = vsel %vm37, %v30, 0
    %vm41 = vcmask 1043456
    %v43 = vsel %vm41, %v29, 0
    %45 = vmatprep.subr.mxu0 0.0
    %46 = vmatpush1.msra.mxu0 %v43
    %47 = vmatprep.subr.mxu0 0.0
    %48 = vmatpush1.msra.mxu0 0.0
    %49 = vmatprep.subr.mxu0 0.0
    %50 = vmatpush1.msra.mxu0 0.0
    %51 = vmatprep.subr.mxu0 0.0
    %52 = vmatpush1.msra.mxu0 0.0
    %53 = vmatprep.subr.mxu0 0.0
    %54 = vmatpush1.msra.mxu0 0.0
    %55 = vmatprep.subr.mxu0 0.0
    %56 = vmatpush1.msra.mxu0 0.0
    %57 = vmatprep.subr.mxu0 0.0
    %58 = vmatpush1.msra.mxu0 0.0
    %59 = vmatprep.subr.mxu0 0.0
    %60 = vmatpush1.msra.mxu0 0.0
    %61 = vmatprep.subr.mxu0 0.0
    %62 = vmatpush1.msra.mxu0 0.0
    %63 = vmatprep.subr.mxu0 0.0
    %64 = vmatpush1.msra.mxu0 0.0
    %65 = vmatprep.subr.mxu0 0.0
    %66 = vmatpush1.msra.mxu0 0.0
    %67 = vmatprep.subr.mxu0 0.0
    %68 = vmatpush1.msra.mxu0 0.0
    %69 = vmatprep.subr.mxu0 0.0
    %70 = vmatpush1.msra.mxu0 0.0
    %71 = vmatprep.subr.mxu0 0.0
    %72 = vmatpush1.msra.mxu0 0.0
    %73 = vmatprep.subr.mxu0 0.0
    %74 = vmatpush1.msra.mxu0 0.0
    %75 = vmatprep.subr.mxu0 0.0
    %76 = vmatpush1.msra.mxu0 0.0
    %77 = vmatprep.subr.mxu0 0.0
    %78 = vmatpush1.msra.mxu0 0.0
    %79 = vmatprep.subr.mxu0 0.0
    %80 = vmatpush1.msra.mxu0 0.0
    %81 = vmatprep.subr.mxu0 0.0
    %82 = vmatpush1.msra.mxu0 0.0
    %83 = vmatprep.subr.mxu0 0.0
    %84 = vmatpush1.msra.mxu0 0.0
    %85 = vmatprep.subr.mxu0 0.0
    %86 = vmatpush1.msra.mxu0 0.0
    %87 = vmatprep.subr.mxu0 0.0
    %88 = vmatpush1.msra.mxu0 0.0
    %89 = vmatprep.subr.mxu0 0.0
    %90 = vmatpush1.msra.mxu0 0.0
    %91 = vmatprep.subr.mxu0 0.0
    %92 = vmatpush1.msra.mxu0 0.0
    %93 = vmatprep.subr.mxu0 0.0
    %94 = vmatpush1.msra.mxu0 0.0
    %95 = vmatprep.subr.mxu0 0.0
    %96 = vmatpush1.msra.mxu0 0.0
    %97 = vmatprep.subr.mxu0 0.0
    %98 = vmatpush1.msra.mxu0 0.0
    %99 = vmatprep.subr.mxu0 0.0
    %100 = vmatpush1.msra.mxu0 0.0
    %101 = vmatprep.subr.mxu0 0.0
    %102 = vmatpush1.msra.mxu0 0.0
    %103 = vmatprep.subr.mxu0 0.0
    %104 = vmatpush1.msra.mxu0 0.0
    %105 = vmatprep.subr.mxu0 0.0
    %106 = vmatpush1.msra.mxu0 0.0
    %107 = vmatprep.subr.mxu0 0.0
    %108 = vmatpush1.msra.mxu0 0.0
    %109 = vmatprep.mubr.f32.mxu0 0.0
    %110 = vmatmul.mubr.f32.gmra.mrb[0].mxu0 %v39
    %v111 = vpop.f32.mrb[0].mxu0
    %v112 = vadd.f32 %v35, %v111
    %v113 = vpop.f32.mrb[0].mxu0
    %114 = vdwg.mxu0
    %v115 = vmax.f32 %v112, 0.0
    %v116 = vld [vmem:[%s3] sm:$0xff]
    %v117 = vld [vmem:[%s4] sm:$0xff]
    %119 = vset.pattern.permute.xlu0 0
    %120 = vperm.xlu0 %119, %v117
    %v121 = vpop.permute.xlu0 %120
    %vm123 = vcmask 64512
    %v125 = vsel %vm123, %v116, 0
    %127 = vmatprep.subr.mxu0 0.0
    %128 = vmatpush1.msra.mxu0 %v115
    %129 = vmatprep.subr.mxu0 0.0
    %130 = vmatpush1.msra.mxu0 0.0
    %131 = vmatprep.subr.mxu0 0.0
    %132 = vmatpush1.msra.mxu0 0.0
    %133 = vmatprep.subr.mxu0 0.0
    %134 = vmatpush1.msra.mxu0 0.0
    %135 = vmatprep.subr.mxu0 0.0
    %136 = vmatpush1.msra.mxu0 0.0
    %137 = vmatprep.subr.mxu0 0.0
    %138 = vmatpush1.msra.mxu0 0.0
    %139 = vmatprep.subr.mxu0 0.0
    %140 = vmatpush1.msra.mxu0 0.0
    %141 = vmatprep.subr.mxu0 0.0
    %142 = vmatpush1.msra.mxu0 0.0
    %143 = vmatprep.subr.mxu0 0.0
    %144 = vmatpush1.msra.mxu0 0.0
    %145 = vmatprep.subr.mxu0 0.0
    %146 = vmatpush1.msra.mxu0 0.0
    %147 = vmatprep.subr.mxu0 0.0
    %148 = vmatpush1.msra.mxu0 0.0
    %149 = vmatprep.subr.mxu0 0.0
    %150 = vmatpush1.msra.mxu0 0.0
    %151 = vmatprep.subr.mxu0 0.0
    %152 = vmatpush1.msra.mxu0 0.0
    %153 = vmatprep.subr.mxu0 0.0
    %154 = vmatpush1.msra.mxu0 0.0
    %155 = vmatprep.subr.mxu0 0.0
    %156 = vmatpush1.msra.mxu0 0.0
    %157 = vmatprep.subr.mxu0 0.0
    %158 = vmatpush1.msra.mxu0 0.0
    %159 = vmatprep.subr.mxu0 0.0
    %160 = vmatpush1.msra.mxu0 0.0
    %161 = vmatprep.subr.mxu0 0.0
    %162 = vmatpush1.msra.mxu0 0.0
    %163 = vmatprep.subr.mxu0 0.0
    %164 = vmatpush1.msra.mxu0 0.0
    %165 = vmatprep.subr.mxu0 0.0
    %166 = vmatpush1.msra.mxu0 0.0
    %167 = vmatprep.subr.mxu0 0.0
    %168 = vmatpush1.msra.mxu0 0.0
    %169 = vmatprep.subr.mxu0 0.0
    %170 = vmatpush1.msra.mxu0 0.0
    %171 = vmatprep.subr.mxu0 0.0
    %172 = vmatpush1.msra.mxu0 0.0
    %173 = vmatprep.subr.mxu0 0.0
    %174 = vmatpush1.msra.mxu0 0.0
    %175 = vmatprep.subr.mxu0 0.0
    %176 = vmatpush1.msra.mxu0 0.0
    %177 = vmatprep.subr.mxu0 0.0
    %178 = vmatpush1.msra.mxu0 0.0
    %179 = vmatprep.subr.mxu0 0.0
    %180 = vmatpush1.msra.mxu0 0.0
    %181 = vmatprep.subr.mxu0 0.0
    %182 = vmatpush1.msra.mxu0 0.0
    %183 = vmatprep.subr.mxu0 0.0
    %184 = vmatpush1.msra.mxu0 0.0
    %185 = vmatprep.subr.mxu0 0.0
    %186 = vmatpush1.msra.mxu0 0.0
    %187 = vmatprep.subr.mxu0 0.0
    %188 = vmatpush1.msra.mxu0 0.0
    %189 = vmatprep.subr.mxu0 0.0
    %190 = vmatpush1.msra.mxu0 0.0
    %191 = vmatprep.mubr.f32.mxu0 0.0
    %192 = vmatmul.mubr.f32.gmra.mrb[0].mxu0 %v125
    %v193 = vpop.f32.mrb[0].mxu0
    %v194 = vadd.f32 %v121, %v193
    %v195 = vpop.f32.mrb[0].mxu0
    %196 = vdwg.mxu0
    %v197 = vmax.f32 %v194, 0.0
    %v198 = vld [vmem:[%s5] sm:$0x1]
    %v199 = vld [vmem:[#allocation2] sm:$0x1]
    %201 = vset.pattern.permute.xlu0 0
    %202 = vperm.xlu0 %201, %v199
    %v203 = vpop.permute.xlu0 %202
    %v205 = vlaneseq
    %v206 = vshrl.u32 %v205, 7
    %v207 = vsub.s32 0, %v206
    %v208 = vrot.slane %v203, %v207
    %v210 = vsel %vm123, %v198, 0
    %212 = vmatprep.subr.mxu0 0.0
    %213 = vmatpush1.msra.mxu0 %v197
    %214 = vmatprep.subr.mxu0 0.0
    %215 = vmatpush1.msra.mxu0 0.0
    %216 = vmatprep.subr.mxu0 0.0
    %217 = vmatpush1.msra.mxu0 0.0
    %218 = vmatprep.subr.mxu0 0.0
    %219 = vmatpush1.msra.mxu0 0.0
    %220 = vmatprep.subr.mxu0 0.0
    %221 = vmatpush1.msra.mxu0 0.0
    %222 = vmatprep.subr.mxu0 0.0
    %223 = vmatpush1.msra.mxu0 0.0
    %224 = vmatprep.subr.mxu0 0.0
    %225 = vmatpush1.msra.mxu0 0.0
    %226 = vmatprep.subr.mxu0 0.0
    %227 = vmatpush1.msra.mxu0 0.0
    %228 = vmatprep.subr.mxu0 0.0
    %229 = vmatpush1.msra.mxu0 0.0
    %230 = vmatprep.subr.mxu0 0.0
    %231 = vmatpush1.msra.mxu0 0.0
    %232 = vmatprep.subr.mxu0 0.0
    %233 = vmatpush1.msra.mxu0 0.0
    %234 = vmatprep.subr.mxu0 0.0
    %235 = vmatpush1.msra.mxu0 0.0
    %236 = vmatprep.subr.mxu0 0.0
    %237 = vmatpush1.msra.mxu0 0.0
    %238 = vmatprep.subr.mxu0 0.0
    %239 = vmatpush1.msra.mxu0 0.0
    %240 = vmatprep.subr.mxu0 0.0
    %241 = vmatpush1.msra.mxu0 0.0
    %242 = vmatprep.subr.mxu0 0.0
    %243 = vmatpush1.msra.mxu0 0.0
    %244 = vmatprep.subr.mxu0 0.0
    %245 = vmatpush1.msra.mxu0 0.0
    %246 = vmatprep.subr.mxu0 0.0
    %247 = vmatpush1.msra.mxu0 0.0
    %248 = vmatprep.subr.mxu0 0.0
    %249 = vmatpush1.msra.mxu0 0.0
    %250 = vmatprep.subr.mxu0 0.0
    %251 = vmatpush1.msra.mxu0 0.0
    %252 = vmatprep.subr.mxu0 0.0
    %253 = vmatpush1.msra.mxu0 0.0
    %254 = vmatprep.subr.mxu0 0.0
    %255 = vmatpush1.msra.mxu0 0.0
    %256 = vmatprep.subr.mxu0 0.0
    %257 = vmatpush1.msra.mxu0 0.0
    %258 = vmatprep.subr.mxu0 0.0
    %259 = vmatpush1.msra.mxu0 0.0
    %260 = vmatprep.subr.mxu0 0.0
    %261 = vmatpush1.msra.mxu0 0.0
    %262 = vmatprep.subr.mxu0 0.0
    %263 = vmatpush1.msra.mxu0 0.0
    %264 = vmatprep.subr.mxu0 0.0
    %265 = vmatpush1.msra.mxu0 0.0
    %266 = vmatprep.subr.mxu0 0.0
    %267 = vmatpush1.msra.mxu0 0.0
    %268 = vmatprep.subr.mxu0 0.0
    %269 = vmatpush1.msra.mxu0 0.0
    %270 = vmatprep.subr.mxu0 0.0
    %271 = vmatpush1.msra.mxu0 0.0
    %272 = vmatprep.subr.mxu0 0.0
    %273 = vmatpush1.msra.mxu0 0.0
    %274 = vmatprep.subr.mxu0 0.0
    %275 = vmatpush1.msra.mxu0 0.0
    %276 = vmatprep.mubr.f32.mxu0 0.0
    %277 = vmatmul.mubr.f32.gmra.mrb[0].mxu0 %v210
    %v278 = vpop.f32.mrb[0].mxu0
    %v279 = vadd.f32 %v208, %v278
    %v280 = vpop.f32.mrb[0].mxu0
    %281 = vdwg.mxu0
    %v282 = vsub.f32 0.0, %v279
    %v283 = vmul.f32 %v282, 1.442695
    %v284 = vpow.pop %v283
    %v285 = vadd.f32 %v284, 1.0
    %v286 = vrcp.pop %v285
    %287 = vst [vmem:[#allocation3] sm:$0x1] %v286
    // Predicated region
    $region30: #{tpu_custom_call.1} parent=1 // pred_check
      _
    $region31: #{tpu_custom_call.1} parent=1 // pred_check_branch
      %289 = sbr.rel (0) target = $region33
    $region32: #{tpu_custom_call.1} parent=1 // pred_region
      %s291 = ssub.s32 16, 16
      %292 = vsyncadd [#allocation4], %s291
      %s294 = sshll.u32 [#allocation3], 4
      %s295 = int_to_ptr.vmem [resolvable:$true] %s294
      %297 = dma.vmem_to_hbm [thread:$0]  %s295, 16, %s7, [#allocation4]
    $region33: #{tpu_custom_call.1} parent=1 // pred_fallthru
      _
    // Predicated region
    $region34: #{tpu_custom_call.1} parent=1 // pred_check
      _
    $region35: #{tpu_custom_call.1} parent=1 // pred_check_branch
      %299 = sbr.rel (0) target = $region37
    $region36: #{tpu_custom_call.1} parent=1 // pred_region
      %300 = dma.done [#allocation4], 16
    $region37: #{tpu_custom_call.1} parent=1 // pred_fallthru
      _
    %301 = vsyncpa [#allocation4], 1

</llo_original>
